<compile_context>
chip_gen: v7x
topology: tpu7x:2x2x1
jax: 0.10.0
libtpu: 0.0.40
codegen_flags: <defaults>
</compile_context>

<pallas_src>
import functools
import math

import jax
import jax.numpy as jnp
from jax.experimental import pallas as pl
from jax.experimental.pallas import tpu as pltpu


def policy_kernel(x_ref, w1_ref, b1_ref, w2_ref, b2_ref, o_ref, *, use_bf16):
    # fc1 (+ relu): optionally cast the matmul inputs to bf16 *inside* the
    # kernel (native MXU datapath); accumulate in f32.
    x = x_ref[...]
    w1 = w1_ref[...]
    if use_bf16:
        x = x.astype(jnp.bfloat16)
        w1 = w1.astype(jnp.bfloat16)
    h = jnp.dot(x, w1, preferred_element_type=jnp.float32)
    h = jnp.maximum(h + b1_ref[...], 0.0)          # b1 (1, hidden) broadcasts

    # fc2 stays in f32 end-to-end (tiny matmul; accuracy-positive, perf-neutral).
    logits = jnp.dot(h, w2_ref[...], preferred_element_type=jnp.float32)
    logits = logits + b2_ref[...]                  # b2 (1, act)

    # Numerically-stable softmax over the last dim; exact division so each row
    # sums to 1 to f32 precision (probabilities feed Categorical downstream).
    m = jnp.max(logits, axis=-1, keepdims=True)
    e = jnp.exp(logits - m)
    denom = jnp.sum(e, axis=-1, keepdims=True)
    o_ref[...] = (e / denom).astype(o_ref.dtype)


def _num_tensorcores():
    """Best-effort detection of TensorCores per chip (2 on v7x, else 1)."""
    try:
        kind = jax.devices()[0].device_kind.lower()
        return 2 if ("tpu" in kind and "7" in kind) else 1
    except Exception:  # interpret mode / non-TPU backend
        return 1


def _select_batch_tile(batch, block_batch, num_cores):
    """Pick a batch tile that divides `batch` exactly (no padding, no slicing).

    * Small/medium batch on single-TC: one tile (grid=(1,)).
    * Small/medium batch on 2-TC chips: exactly 2 tiles (one per core).
    * Large batch: largest divisor of batch <= block_batch that is a multiple
      of 8 (sublane constraint); falls back to the full batch if none exists.
    """
    if batch <= block_batch * num_cores:
        if num_cores > 1 and batch % num_cores == 0:
            tb = batch // num_cores
            if tb == batch or tb % 8 == 0:
                return tb
        return batch
    for tb in range(min(block_batch, batch), 7, -1):
        if batch % tb == 0 and tb % 8 == 0:
            return tb
    return batch


def policy_forward(x, w1, b1, w2, b2, *, block_batch=1024, use_bf16=True):
    """softmax(relu(x @ w1 + b1) @ w2 + b2, axis=-1) via a batch-tiled Pallas kernel."""
    batch, obs_dim = x.shape
    hidden_dim = w1.shape[1]
    act_dim = w2.shape[1]

    # Biases as (1, N) f32 rows so they broadcast over the batch tile.
    b1_c = jnp.asarray(b1, jnp.float32).reshape(1, hidden_dim)
    b2_c = jnp.asarray(b2, jnp.float32).reshape(1, act_dim)

    tb = _select_batch_tile(batch, block_batch, _num_tensorcores())
    grid = (batch // tb,)

    kernel = functools.partial(policy_kernel, use_bf16=use_bf16)

    out = pl.pallas_call(
        kernel,
        out_shape=jax.ShapeDtypeStruct((batch, act_dim), jnp.float32),
        grid=grid,
        in_specs=[
            pl.BlockSpec((tb, obs_dim), lambda i: (i, 0)),          # x: tiled over batch
            pl.BlockSpec((obs_dim, hidden_dim), lambda i: (0, 0)),  # W1: VMEM-resident
            pl.BlockSpec((1, hidden_dim), lambda i: (0, 0)),        # b1: VMEM-resident
            pl.BlockSpec((hidden_dim, act_dim), lambda i: (0, 0)),  # W2: VMEM-resident
            pl.BlockSpec((1, act_dim), lambda i: (0, 0)),           # b2: VMEM-resident
        ],
        out_specs=pl.BlockSpec((tb, act_dim), lambda i: (i, 0)),
        compiler_params=pltpu.CompilerParams(
            dimension_semantics=("parallel",),  # independent batch tiles (2-TC sharding on v7x)
        ),
    )(x, w1, b1_c, w2, b2_c)

    return out


def init_policy_params(key, obs_dim, hidden_dim, act_dim):
    """Deterministic init mirroring nn.Linear's default U(-1/sqrt(fan_in), 1/sqrt(fan_in))."""
    k1, k2, k3, k4 = jax.random.split(key, 4)
    bound1 = 1.0 / math.sqrt(obs_dim)
    bound2 = 1.0 / math.sqrt(hidden_dim)
    w1 = jax.random.uniform(k1, (obs_dim, hidden_dim), jnp.float32, -bound1, bound1)
    b1 = jax.random.uniform(k2, (hidden_dim,), jnp.float32, -bound1, bound1)
    w2 = jax.random.uniform(k3, (hidden_dim, act_dim), jnp.float32, -bound2, bound2)
    b2 = jax.random.uniform(k4, (act_dim,), jnp.float32, -bound2, bound2)
    return w1, b1, w2, b2


if __name__ == "__main__":
    # TODO(synk): get_action (Categorical sampling / log_prob) is host-side RL
    # glue, not part of the forward pass; only the forward is implemented here.
    batch, obs_dim, hidden_dim, act_dim = 128, 16, 32, 8

    key = jax.random.PRNGKey(0)
    kx, kp = jax.random.split(key)
    x = jax.random.normal(kx, (batch, obs_dim), jnp.float32)
    w1, b1, w2, b2 = init_policy_params(kp, obs_dim, hidden_dim, act_dim)

    probs = policy_forward(x, w1, b1, w2, b2)
    probs = jax.block_until_ready(probs)
    assert probs.shape == (batch, act_dim)

    # Matched-precision reference: bf16 fc1 inputs, f32 accumulation, f32 fc2,
    # exact softmax — same numerics as the kernel.
    h_ref = jnp.maximum(
        jnp.dot(x.astype(jnp.bfloat16), w1.astype(jnp.bfloat16),
                preferred_element_type=jnp.float32) + b1[None, :], 0.0)
    logits_ref = jnp.dot(h_ref, w2, preferred_element_type=jnp.float32) + b2[None, :]
    ref = jax.nn.softmax(logits_ref, axis=-1)
    assert jnp.allclose(probs, ref, atol=2e-3), "mismatch vs matched-precision ref"

    # Loose check against the pure-f32 (PyTorch-equivalent) reference.
    ref_f32 = jax.nn.softmax(jnp.maximum(x @ w1 + b1, 0.0) @ w2 + b2, axis=-1)
    assert jnp.allclose(probs, ref_f32, atol=1e-2), "mismatch vs f32 ref"

    # Rows are valid probability distributions (exact division in-kernel).
    assert jnp.allclose(jnp.sum(probs, axis=-1), 1.0, atol=1e-5)

    print("KERNEL_OK")
</pallas_src>

<mosaic_0001>
module attributes {stable_mosaic.version = 11 : i64} {
  func.func @policy_kernel(%arg0: i32, %arg1: memref<128x16xf32, #tpu.memory_space<vmem>>, %arg2: memref<16x32xf32, #tpu.memory_space<vmem>>, %arg3: memref<1x32xf32, #tpu.memory_space<vmem>>, %arg4: memref<32x8xf32, #tpu.memory_space<vmem>>, %arg5: memref<1x8xf32, #tpu.memory_space<vmem>>, %arg6: memref<128x8xf32, #tpu.memory_space<vmem>>) attributes {dimension_semantics = [#tpu.dimension_semantics<parallel>], iteration_bounds = array<i64: 1>, scalar_prefetch = 0 : i64, scratch_operands = 0 : i64, tpu.core_type = #tpu.core_type<tc>, window_params = [{transform_indices = @transform_0, window_bounds = array<i64: 128, 16>}, {pipeline_mode = #tpu.pipeline_mode<synchronous>, transform_indices = @transform_1, window_bounds = array<i64: 16, 32>}, {pipeline_mode = #tpu.pipeline_mode<synchronous>, transform_indices = @transform_2, window_bounds = array<i64: 1, 32>}, {pipeline_mode = #tpu.pipeline_mode<synchronous>, transform_indices = @transform_3, window_bounds = array<i64: 32, 8>}, {pipeline_mode = #tpu.pipeline_mode<synchronous>, transform_indices = @transform_4, window_bounds = array<i64: 1, 8>}, {transform_indices = @transform_5, window_bounds = array<i64: 128, 8>}]} {
    %c0 = arith.constant 0 : index
    %c0_0 = arith.constant 0 : index
    %0 = vector.load %arg1[%c0, %c0_0] : memref<128x16xf32, #tpu.memory_space<vmem>>, vector<128x16xf32>
    %c0_1 = arith.constant 0 : index
    %c0_2 = arith.constant 0 : index
    %1 = vector.load %arg2[%c0_1, %c0_2] : memref<16x32xf32, #tpu.memory_space<vmem>>, vector<16x32xf32>
    %2 = arith.truncf %0 : vector<128x16xf32> to vector<128x16xbf16>
    %3 = arith.truncf %1 : vector<16x32xf32> to vector<16x32xbf16>
    %cst = arith.constant dense<0.000000e+00> : vector<128x32xf32>
    %4 = tpu.matmul %2, %3, %cst {dimension_numbers = #tpu.dot_dimension_numbers<[1], [0], [0], [1], [0, 0, 1, 1], [], []>} : vector<128x16xbf16>, vector<16x32xbf16>, vector<128x32xf32> -> vector<128x32xf32>
    %c0_3 = arith.constant 0 : index
    %c0_4 = arith.constant 0 : index
    %5 = vector.load %arg3[%c0_3, %c0_4] : memref<1x32xf32, #tpu.memory_space<vmem>>, vector<1x32xf32>
    %6 = vector.broadcast %5 : vector<1x32xf32> to vector<128x32xf32>
    %7 = arith.addf %4, %6 : vector<128x32xf32>
    %cst_5 = arith.constant 0.000000e+00 : f32
    %8 = vector.broadcast %cst_5 : f32 to vector<128x32xf32>
    %9 = arith.maximumf %7, %8 : vector<128x32xf32>
    %c0_6 = arith.constant 0 : index
    %c0_7 = arith.constant 0 : index
    %10 = vector.load %arg4[%c0_6, %c0_7] : memref<32x8xf32, #tpu.memory_space<vmem>>, vector<32x8xf32>
    %cst_8 = arith.constant dense<0.000000e+00> : vector<128x8xf32>
    %11 = tpu.matmul %9, %10, %cst_8 {dimension_numbers = #tpu.dot_dimension_numbers<[1], [0], [0], [1], [0, 0, 1, 1], [], []>} : vector<128x32xf32>, vector<32x8xf32>, vector<128x8xf32> -> vector<128x8xf32>
    %c0_9 = arith.constant 0 : index
    %c0_10 = arith.constant 0 : index
    %12 = vector.load %arg5[%c0_9, %c0_10] : memref<1x8xf32, #tpu.memory_space<vmem>>, vector<1x8xf32>
    %13 = vector.broadcast %12 : vector<1x8xf32> to vector<128x8xf32>
    %14 = arith.addf %11, %13 : vector<128x8xf32>
    %cst_11 = arith.constant dense<0xFF800000> : vector<128xf32>
    %15 = vector.multi_reduction <maximumf>, %14, %cst_11 [1] : vector<128x8xf32> to vector<128xf32>
    %16 = vector.shape_cast %15 : vector<128xf32> to vector<128x1xf32>
    %17 = vector.broadcast %16 : vector<128x1xf32> to vector<128x8xf32>
    %18 = arith.subf %14, %17 : vector<128x8xf32>
    %19 = math.exp %18 : vector<128x8xf32>
    %cst_12 = arith.constant dense<0.000000e+00> : vector<128xf32>
    %20 = vector.multi_reduction <add>, %19, %cst_12 [1] : vector<128x8xf32> to vector<128xf32>
    %21 = vector.shape_cast %20 : vector<128xf32> to vector<128x1xf32>
    %22 = vector.broadcast %21 : vector<128x1xf32> to vector<128x8xf32>
    %23 = arith.divf %19, %22 : vector<128x8xf32>
    %c0_13 = arith.constant 0 : index
    %c0_14 = arith.constant 0 : index
    %24 = vector.load %arg6[%c0_13, %c0_14] : memref<128x8xf32, #tpu.memory_space<vmem>>, vector<128x8xf32>
    tpu.vector_store %arg6[%c0_13, %c0_14], %23 {strides = array<i32>} : memref<128x8xf32, #tpu.memory_space<vmem>>, vector<128x8xf32>,
    return
  }
  func.func @transform_0(%arg0: i32) -> (i32, i32) {
    %c0_i32 = arith.constant 0 : i32
    %c0_i32_0 = arith.constant 0 : i32
    return %arg0, %c0_i32 : i32, i32
  }
  func.func @transform_1(%arg0: i32) -> (i32, i32) {
    %c0_i32 = arith.constant 0 : i32
    %c0_i32_0 = arith.constant 0 : i32
    %c0_i32_1 = arith.constant 0 : i32
    return %c0_i32, %c0_i32_0 : i32, i32
  }
  func.func @transform_2(%arg0: i32) -> (i32, i32) {
    %c0_i32 = arith.constant 0 : i32
    %c0_i32_0 = arith.constant 0 : i32
    %c0_i32_1 = arith.constant 0 : i32
    return %c0_i32, %c0_i32_0 : i32, i32
  }
  func.func @transform_3(%arg0: i32) -> (i32, i32) {
    %c0_i32 = arith.constant 0 : i32
    %c0_i32_0 = arith.constant 0 : i32
    %c0_i32_1 = arith.constant 0 : i32
    return %c0_i32, %c0_i32_0 : i32, i32
  }
  func.func @transform_4(%arg0: i32) -> (i32, i32) {
    %c0_i32 = arith.constant 0 : i32
    %c0_i32_0 = arith.constant 0 : i32
    %c0_i32_1 = arith.constant 0 : i32
    return %c0_i32, %c0_i32_0 : i32, i32
  }
  func.func @transform_5(%arg0: i32) -> (i32, i32) {
    %c0_i32 = arith.constant 0 : i32
    %c0_i32_0 = arith.constant 0 : i32
    return %arg0, %c0_i32 : i32, i32
  }
}

</mosaic_0001>

<llo_original>
// kernel: tpu_custom_call.1
$region0: #{tpu_custom_call.1}
  #allocation0 [shape = 'u32[]', space=smem, size = 0x4, offset = 0x4, fixed_abs, tag = 'smem constant byte address 0x4 - core index']
  #allocation1 [shape = 'u32[144,128]{1,0:T(1,128)}', space=vmem, size = 0x12000, scoped, tag = 'internal scratch']
  %s0 = inlined_call_operand.vmem [shape: f32[128,16], index: 0, kind: input, shape index: {}]
  %s1 = inlined_call_operand.vmem [shape: f32[16,32], index: 1, kind: input, shape index: {}]
  %s2 = inlined_call_operand.vmem [shape: f32[1,32], index: 2, kind: input, shape index: {}]
  %s3 = inlined_call_operand.vmem [shape: f32[32,8], index: 3, kind: input, shape index: {}]
  %s4 = inlined_call_operand.vmem [shape: f32[1,8], index: 4, kind: input, shape index: {}]
  %s5 = inlined_call_operand.vmem [shape: f32[128,8], index: 5, kind: output, shape index: {}]
  %s6 = sld [smem:[#allocation0]]
  $region30: #{tpu_custom_call.1} parent=0
    _
  %s8 = ssub.s32 1, %s6
  %s9 = scalar_select 0, %s8, %s6
  // Predicated region
  $region2: #{tpu_custom_call.1} parent=0 // pred_check
    _
  $region3: #{tpu_custom_call.1} parent=0 // pred_check_branch
    %11 = sbr.rel (0) target = $region5
  $region4: #{tpu_custom_call.1} parent=0 // pred_region
    _
  $region5: #{tpu_custom_call.1} parent=0 // pred_fallthru
    _
  // Predicated region
  $region6: #{tpu_custom_call.1} parent=0 // pred_check
    _
  $region7: #{tpu_custom_call.1} parent=0 // pred_check_branch
    %13 = sbr.rel (0) target = $region9
  $region8: #{tpu_custom_call.1} parent=0 // pred_region
    _
  $region9: #{tpu_custom_call.1} parent=0 // pred_fallthru
    _
  // Predicated region
  $region10: #{tpu_custom_call.1} parent=0 // pred_check
    _
  $region11: #{tpu_custom_call.1} parent=0 // pred_check_branch
    %15 = sbr.rel (0) target = $region13
  $region12: #{tpu_custom_call.1} parent=0 // pred_region
    _
  $region13: #{tpu_custom_call.1} parent=0 // pred_fallthru
    _
  // Predicated region
  $region14: #{tpu_custom_call.1} parent=0 // pred_check
    _
  $region15: #{tpu_custom_call.1} parent=0 // pred_check_branch
    %17 = sbr.rel (0) target = $region17
  $region16: #{tpu_custom_call.1} parent=0 // pred_region
    _
  $region17: #{tpu_custom_call.1} parent=0 // pred_fallthru
    _
  // Predicated region
  $region18: #{tpu_custom_call.1} parent=0 // pred_check
    _
  $region19: #{tpu_custom_call.1} parent=0 // pred_check_branch
    %19 = sbr.rel (0) target = $region21
  $region20: #{tpu_custom_call.1} parent=0 // pred_region
    _
  $region21: #{tpu_custom_call.1} parent=0 // pred_fallthru
    _
  %v21 = vld [vmem:[%s0] sm:$0xff]
  %v22 = vld [vmem:[%s0 + $0x8] sm:$0xff]
  %v23 = vld [vmem:[%s0 + $0x10] sm:$0xff]
  %v24 = vld [vmem:[%s0 + $0x18] sm:$0xff]
  %v25 = vld [vmem:[%s0 + $0x20] sm:$0xff]
  %v26 = vld [vmem:[%s0 + $0x28] sm:$0xff]
  %v27 = vld [vmem:[%s0 + $0x30] sm:$0xff]
  %v28 = vld [vmem:[%s0 + $0x38] sm:$0xff]
  %v29 = vld [vmem:[%s0 + $0x40] sm:$0xff]
  %v30 = vld [vmem:[%s0 + $0x48] sm:$0xff]
  %v31 = vld [vmem:[%s0 + $0x50] sm:$0xff]
  %v32 = vld [vmem:[%s0 + $0x58] sm:$0xff]
  %v33 = vld [vmem:[%s0 + $0x60] sm:$0xff]
  %v34 = vld [vmem:[%s0 + $0x68] sm:$0xff]
  %v35 = vld [vmem:[%s0 + $0x70] sm:$0xff]
  %v36 = vld [vmem:[%s0 + $0x78] sm:$0xff]
  %v37 = vld [vmem:[%s1] sm:$0xff]
  %v38 = vld [vmem:[%s1 + $0x8] sm:$0xff]
  %v39 = vpack.c.bf16 %v22, %v21
  %v40 = vpack.c.bf16 %v24, %v23
  %v41 = vpack.c.bf16 %v26, %v25
  %v42 = vpack.c.bf16 %v28, %v27
  %v43 = vpack.c.bf16 %v30, %v29
  %v44 = vpack.c.bf16 %v32, %v31
  %v45 = vpack.c.bf16 %v34, %v33
  %v46 = vpack.c.bf16 %v36, %v35
  %v47 = vpack.c.bf16 %v38, %v37
  %v48 = vld [vmem:[%s2] sm:$0x1]
  %v50 = vlaneseq
  %v51 = vshrl.u32 %v50, 7
  %v52 = vsub.s32 0, %v51
  %v53 = vrot.slane %v48, %v52
  %vm55 = vcmask 130048
  %v57 = vsel %vm55, %v39, 0
  %v60 = vsel %vm55, %v40, 0
  %v63 = vsel %vm55, %v41, 0
  %v66 = vsel %vm55, %v42, 0
  %v69 = vsel %vm55, %v43, 0
  %v72 = vsel %vm55, %v44, 0
  %v75 = vsel %vm55, %v45, 0
  %v78 = vsel %vm55, %v46, 0
  %80 = vmatprep.subr.bf16.mxu0 0
  %81 = vmatpush1.bf16.msra.mxu0 %v47
  %82 = vmatprep.subr.bf16.mxu0 0
  %83 = vmatpush1.bf16.msra.mxu0 0
  %84 = vmatprep.subr.bf16.mxu0 0
  %85 = vmatpush1.bf16.msra.mxu0 0
  %86 = vmatprep.subr.bf16.mxu0 0
  %87 = vmatpush1.bf16.msra.mxu0 0
  %88 = vmatprep.subr.bf16.mxu0 0
  %89 = vmatpush1.bf16.msra.mxu0 0
  %90 = vmatprep.subr.bf16.mxu0 0
  %91 = vmatpush1.bf16.msra.mxu0 0
  %92 = vmatprep.subr.bf16.mxu0 0
  %93 = vmatpush1.bf16.msra.mxu0 0
  %94 = vmatprep.subr.bf16.mxu0 0
  %95 = vmatpush1.bf16.msra.mxu0 0
  %96 = vmatprep.subr.bf16.mxu0 0
  %97 = vmatpush1.bf16.msra.mxu0 0
  %98 = vmatprep.subr.bf16.mxu0 0
  %99 = vmatpush1.bf16.msra.mxu0 0
  %100 = vmatprep.subr.bf16.mxu0 0
  %101 = vmatpush1.bf16.msra.mxu0 0
  %102 = vmatprep.subr.bf16.mxu0 0
  %103 = vmatpush1.bf16.msra.mxu0 0
  %104 = vmatprep.subr.bf16.mxu0 0
  %105 = vmatpush1.bf16.msra.mxu0 0
  %106 = vmatprep.subr.bf16.mxu0 0
  %107 = vmatpush1.bf16.msra.mxu0 0
  %108 = vmatprep.subr.bf16.mxu0 0
  %109 = vmatpush1.bf16.msra.mxu0 0
  %110 = vmatprep.subr.bf16.mxu0 0
  %111 = vmatpush1.bf16.msra.mxu0 0
  %112 = vmatprep.mubr.bf16.mxu0 0
  %113 = vmatmul.mubr.bf16.gmra.mrb[0].mxu0 %v57
  %v114 = vpop.f32.mrb[0].mxu0
  %v115 = vadd.f32 %v53, %v114
  %v116 = vpop.f32.mrb[0].mxu0
  %v117 = vpop.f32.mrb[0].mxu0
  %v118 = vadd.f32 %v53, %v117
  %v119 = vpop.f32.mrb[0].mxu0
  %120 = vmatprep.mubr.bf16.mxu0 0
  %121 = vmatmul.mubr.bf16.gmra.mrb[0].mxu0 %v60
  %v122 = vpop.f32.mrb[0].mxu0
  %v123 = vadd.f32 %v53, %v122
  %v124 = vpop.f32.mrb[0].mxu0
  %v125 = vpop.f32.mrb[0].mxu0
  %v126 = vadd.f32 %v53, %v125
  %v127 = vpop.f32.mrb[0].mxu0
  %128 = vmatprep.mubr.bf16.mxu0 0
  %129 = vmatmul.mubr.bf16.gmra.mrb[0].mxu0 %v63
  %v130 = vpop.f32.mrb[0].mxu0
  %v131 = vadd.f32 %v53, %v130
  %v132 = vpop.f32.mrb[0].mxu0
  %v133 = vpop.f32.mrb[0].mxu0
  %v134 = vadd.f32 %v53, %v133
  %v135 = vpop.f32.mrb[0].mxu0
  %136 = vmatprep.mubr.bf16.mxu0 0
  %137 = vmatmul.mubr.bf16.gmra.mrb[0].mxu0 %v66
  %v138 = vpop.f32.mrb[0].mxu0
  %v139 = vadd.f32 %v53, %v138
  %v140 = vpop.f32.mrb[0].mxu0
  %v141 = vpop.f32.mrb[0].mxu0
  %v142 = vadd.f32 %v53, %v141
  %v143 = vpop.f32.mrb[0].mxu0
  %144 = vmatprep.mubr.bf16.mxu0 0
  %145 = vmatmul.mubr.bf16.gmra.mrb[0].mxu0 %v69
  %v146 = vpop.f32.mrb[0].mxu0
  %v147 = vadd.f32 %v53, %v146
  %v148 = vpop.f32.mrb[0].mxu0
  %v149 = vpop.f32.mrb[0].mxu0
  %v150 = vadd.f32 %v53, %v149
  %v151 = vpop.f32.mrb[0].mxu0
  %152 = vmatprep.mubr.bf16.mxu0 0
  %153 = vmatmul.mubr.bf16.gmra.mrb[0].mxu0 %v72
  %v154 = vpop.f32.mrb[0].mxu0
  %v155 = vadd.f32 %v53, %v154
  %v156 = vpop.f32.mrb[0].mxu0
  %v157 = vpop.f32.mrb[0].mxu0
  %v158 = vadd.f32 %v53, %v157
  %v159 = vpop.f32.mrb[0].mxu0
  %160 = vmatprep.mubr.bf16.mxu0 0
  %161 = vmatmul.mubr.bf16.gmra.mrb[0].mxu0 %v75
  %v162 = vpop.f32.mrb[0].mxu0
  %v163 = vadd.f32 %v53, %v162
  %v164 = vpop.f32.mrb[0].mxu0
  %v165 = vpop.f32.mrb[0].mxu0
  %v166 = vadd.f32 %v53, %v165
  %v167 = vpop.f32.mrb[0].mxu0
  %168 = vmatprep.mubr.bf16.mxu0 0
  %169 = vmatmul.mubr.bf16.gmra.mrb[0].mxu0 %v78
  %v170 = vpop.f32.mrb[0].mxu0
  %v171 = vadd.f32 %v53, %v170
  %v172 = vpop.f32.mrb[0].mxu0
  %v173 = vpop.f32.mrb[0].mxu0
  %v174 = vadd.f32 %v53, %v173
  %v175 = vpop.f32.mrb[0].mxu0
  %176 = vdwg.mxu0
  %v177 = vmax.f32 %v115, 0.0
  %v178 = vmax.f32 %v118, 0.0
  %v179 = vmax.f32 %v123, 0.0
  %v180 = vmax.f32 %v126, 0.0
  %v181 = vmax.f32 %v131, 0.0
  %v182 = vmax.f32 %v134, 0.0
  %v183 = vmax.f32 %v139, 0.0
  %v184 = vmax.f32 %v142, 0.0
  %v185 = vmax.f32 %v147, 0.0
  %v186 = vmax.f32 %v150, 0.0
  %v187 = vmax.f32 %v155, 0.0
  %v188 = vmax.f32 %v158, 0.0
  %v189 = vmax.f32 %v163, 0.0
  %v190 = vmax.f32 %v166, 0.0
  %v191 = vmax.f32 %v171, 0.0
  %v192 = vmax.f32 %v174, 0.0
  %v193 = vld [vmem:[%s3] sm:$0xff]
  %v194 = vld [vmem:[%s3 + $0x8] sm:$0xff]
  %v195 = vld [vmem:[%s3 + $0x10] sm:$0xff]
  %v196 = vld [vmem:[%s3 + $0x18] sm:$0xff]
  %v197 = vld [vmem:[%s4] sm:$0x1]
  %v199 = vlaneseq
  %v200 = vshrl.u32 %v199, 7
  %v201 = vsub.s32 0, %v200
  %v202 = vrot.slane %v197, %v201
  %vm204 = vcmask 261120
  %v206 = vsel %vm204, %v177, 0
  %v209 = vsel %vm204, %v178, 0
  %v212 = vsel %vm204, %v179, 0
  %v215 = vsel %vm204, %v180, 0
  %v218 = vsel %vm204, %v181, 0
  %v221 = vsel %vm204, %v182, 0
  %v224 = vsel %vm204, %v183, 0
  %v227 = vsel %vm204, %v184, 0
  %v230 = vsel %vm204, %v185, 0
  %v233 = vsel %vm204, %v186, 0
  %v236 = vsel %vm204, %v187, 0
  %v239 = vsel %vm204, %v188, 0
  %v242 = vsel %vm204, %v189, 0
  %v245 = vsel %vm204, %v190, 0
  %v248 = vsel %vm204, %v191, 0
  %v251 = vsel %vm204, %v192, 0
  %253 = vmatprep.subr.mxu0 0.0
  %254 = vmatpush1.msra.mxu0 %v193
  %255 = vmatprep.subr.mxu0 0.0
  %256 = vmatpush1.msra.mxu0 %v194
  %257 = vmatprep.subr.mxu0 0.0
  %258 = vmatpush1.msra.mxu0 %v195
  %259 = vmatprep.subr.mxu0 0.0
  %260 = vmatpush1.msra.mxu0 %v196
  %261 = vmatprep.subr.mxu0 0.0
  %262 = vmatpush1.msra.mxu0 0.0
  %263 = vmatprep.subr.mxu0 0.0
  %264 = vmatpush1.msra.mxu0 0.0
  %265 = vmatprep.subr.mxu0 0.0
  %266 = vmatpush1.msra.mxu0 0.0
  %267 = vmatprep.subr.mxu0 0.0
  %268 = vmatpush1.msra.mxu0 0.0
  %269 = vmatprep.subr.mxu0 0.0
  %270 = vmatpush1.msra.mxu0 0.0
  %271 = vmatprep.subr.mxu0 0.0
  %272 = vmatpush1.msra.mxu0 0.0
  %273 = vmatprep.subr.mxu0 0.0
  %274 = vmatpush1.msra.mxu0 0.0
  %275 = vmatprep.subr.mxu0 0.0
  %276 = vmatpush1.msra.mxu0 0.0
  %277 = vmatprep.subr.mxu0 0.0
  %278 = vmatpush1.msra.mxu0 0.0
  %279 = vmatprep.subr.mxu0 0.0
  %280 = vmatpush1.msra.mxu0 0.0
  %281 = vmatprep.subr.mxu0 0.0
  %282 = vmatpush1.msra.mxu0 0.0
  %283 = vmatprep.subr.mxu0 0.0
  %284 = vmatpush1.msra.mxu0 0.0
  %285 = vmatprep.subr.mxu0 0.0
  %286 = vmatpush1.msra.mxu0 0.0
  %287 = vmatprep.subr.mxu0 0.0
  %288 = vmatpush1.msra.mxu0 0.0
  %289 = vmatprep.subr.mxu0 0.0
  %290 = vmatpush1.msra.mxu0 0.0
  %291 = vmatprep.subr.mxu0 0.0
  %292 = vmatpush1.msra.mxu0 0.0
  %293 = vmatprep.subr.mxu0 0.0
  %294 = vmatpush1.msra.mxu0 0.0
  %295 = vmatprep.subr.mxu0 0.0
  %296 = vmatpush1.msra.mxu0 0.0
  %297 = vmatprep.subr.mxu0 0.0
  %298 = vmatpush1.msra.mxu0 0.0
  %299 = vmatprep.subr.mxu0 0.0
  %300 = vmatpush1.msra.mxu0 0.0
  %301 = vmatprep.subr.mxu0 0.0
  %302 = vmatpush1.msra.mxu0 0.0
  %303 = vmatprep.subr.mxu0 0.0
  %304 = vmatpush1.msra.mxu0 0.0
  %305 = vmatprep.subr.mxu0 0.0
  %306 = vmatpush1.msra.mxu0 0.0
  %307 = vmatprep.subr.mxu0 0.0
  %308 = vmatpush1.msra.mxu0 0.0
  %309 = vmatprep.subr.mxu0 0.0
  %310 = vmatpush1.msra.mxu0 0.0
  %311 = vmatprep.subr.mxu0 0.0
  %312 = vmatpush1.msra.mxu0 0.0
  %313 = vmatprep.subr.mxu0 0.0
  %314 = vmatpush1.msra.mxu0 0.0
  %315 = vmatprep.subr.mxu0 0.0
  %316 = vmatpush1.msra.mxu0 0.0
  %317 = vmatprep.mubr.f32.mxu0 0.0
  %318 = vmatmul.mubr.f32.gmra.mrb[0].mxu0 %v206
  %v319 = vpop.f32.mrb[0].mxu0
  %v320 = vadd.f32 %v202, %v319
  %v321 = vpop.f32.mrb[0].mxu0
  %322 = vmatprep.mubr.f32.mxu0 0.0
  %323 = vmatmul.mubr.f32.gmra.mrb[0].mxu0 %v209
  %v324 = vpop.f32.mrb[0].mxu0
  %v325 = vadd.f32 %v202, %v324
  %v326 = vpop.f32.mrb[0].mxu0
  %327 = vmatprep.mubr.f32.mxu0 0.0
  %328 = vmatmul.mubr.f32.gmra.mrb[0].mxu0 %v212
  %v329 = vpop.f32.mrb[0].mxu0
  %v330 = vadd.f32 %v202, %v329
  %v331 = vpop.f32.mrb[0].mxu0
  %332 = vmatprep.mubr.f32.mxu0 0.0
  %333 = vmatmul.mubr.f32.gmra.mrb[0].mxu0 %v215
  %v334 = vpop.f32.mrb[0].mxu0
  %v335 = vadd.f32 %v202, %v334
  %v336 = vpop.f32.mrb[0].mxu0
  %337 = vmatprep.mubr.f32.mxu0 0.0
  %338 = vmatmul.mubr.f32.gmra.mrb[0].mxu0 %v218
  %v339 = vpop.f32.mrb[0].mxu0
  %v340 = vadd.f32 %v202, %v339
  %v341 = vpop.f32.mrb[0].mxu0
  %342 = vmatprep.mubr.f32.mxu0 0.0
  %343 = vmatmul.mubr.f32.gmra.mrb[0].mxu0 %v221
  %v344 = vpop.f32.mrb[0].mxu0
  %v345 = vadd.f32 %v202, %v344
  %v346 = vpop.f32.mrb[0].mxu0
  %347 = vmatprep.mubr.f32.mxu0 0.0
  %348 = vmatmul.mubr.f32.gmra.mrb[0].mxu0 %v224
  %v349 = vpop.f32.mrb[0].mxu0
  %v350 = vadd.f32 %v202, %v349
  %v351 = vpop.f32.mrb[0].mxu0
  %352 = vmatprep.mubr.f32.mxu0 0.0
  %353 = vmatmul.mubr.f32.gmra.mrb[0].mxu0 %v227
  %v354 = vpop.f32.mrb[0].mxu0
  %v355 = vadd.f32 %v202, %v354
  %v356 = vpop.f32.mrb[0].mxu0
  %357 = vmatprep.mubr.f32.mxu0 0.0
  %358 = vmatmul.mubr.f32.gmra.mrb[0].mxu0 %v230
  %v359 = vpop.f32.mrb[0].mxu0
  %v360 = vadd.f32 %v202, %v359
  %v361 = vpop.f32.mrb[0].mxu0
  %362 = vmatprep.mubr.f32.mxu0 0.0
  %363 = vmatmul.mubr.f32.gmra.mrb[0].mxu0 %v233
  %v364 = vpop.f32.mrb[0].mxu0
  %v365 = vadd.f32 %v202, %v364
  %v366 = vpop.f32.mrb[0].mxu0
  %367 = vmatprep.mubr.f32.mxu0 0.0
  %368 = vmatmul.mubr.f32.gmra.mrb[0].mxu0 %v236
  %v369 = vpop.f32.mrb[0].mxu0
  %v370 = vadd.f32 %v202, %v369
  %v371 = vpop.f32.mrb[0].mxu0
  %372 = vmatprep.mubr.f32.mxu0 0.0
  %373 = vmatmul.mubr.f32.gmra.mrb[0].mxu0 %v239
  %v374 = vpop.f32.mrb[0].mxu0
  %v375 = vadd.f32 %v202, %v374
  %v376 = vpop.f32.mrb[0].mxu0
  %377 = vmatprep.mubr.f32.mxu0 0.0
  %378 = vmatmul.mubr.f32.gmra.mrb[0].mxu0 %v242
  %v379 = vpop.f32.mrb[0].mxu0
  %v380 = vadd.f32 %v202, %v379
  %v381 = vpop.f32.mrb[0].mxu0
  %382 = vmatprep.mubr.f32.mxu0 0.0
  %383 = vmatmul.mubr.f32.gmra.mrb[0].mxu0 %v245
  %v384 = vpop.f32.mrb[0].mxu0
  %v385 = vadd.f32 %v202, %v384
  %v386 = vpop.f32.mrb[0].mxu0
  %387 = vmatprep.mubr.f32.mxu0 0.0
  %388 = vmatmul.mubr.f32.gmra.mrb[0].mxu0 %v248
  %v389 = vpop.f32.mrb[0].mxu0
  %v390 = vadd.f32 %v202, %v389
  %v391 = vpop.f32.mrb[0].mxu0
  %392 = vmatprep.mubr.f32.mxu0 0.0
  %393 = vmatmul.mubr.f32.gmra.mrb[0].mxu0 %v251
  %v394 = vpop.f32.mrb[0].mxu0
  %v395 = vadd.f32 %v202, %v394
  %v396 = vpop.f32.mrb[0].mxu0
  %397 = vdwg.mxu0
  %vm398 = vcmask 64512
  %v399 = vsel %vm398, %v320, -inf
  %400 = vmax.xlane.f32.xlu0 %v399
  %v401 = vpop.xlane.xlu0 %400
  %v402 = vsel %vm398, %v325, -inf
  %403 = vmax.xlane.f32.xlu0 %v402
  %v404 = vpop.xlane.xlu0 %403
  %v405 = vsel %vm398, %v330, -inf
  %406 = vmax.xlane.f32.xlu0 %v405
  %v407 = vpop.xlane.xlu0 %406
  %v408 = vsel %vm398, %v335, -inf
  %409 = vmax.xlane.f32.xlu0 %v408
  %v410 = vpop.xlane.xlu0 %409
  %v411 = vsel %vm398, %v340, -inf
  %412 = vmax.xlane.f32.xlu0 %v411
  %v413 = vpop.xlane.xlu0 %412
  %v414 = vsel %vm398, %v345, -inf
  %415 = vmax.xlane.f32.xlu0 %v414
  %v416 = vpop.xlane.xlu0 %415
  %v417 = vsel %vm398, %v350, -inf
  %418 = vmax.xlane.f32.xlu0 %v417
  %v419 = vpop.xlane.xlu0 %418
  %v420 = vsel %vm398, %v355, -inf
  %421 = vmax.xlane.f32.xlu0 %v420
  %v422 = vpop.xlane.xlu0 %421
  %v423 = vsel %vm398, %v360, -inf
  %424 = vmax.xlane.f32.xlu0 %v423
  %v425 = vpop.xlane.xlu0 %424
  %v426 = vsel %vm398, %v365, -inf
  %427 = vmax.xlane.f32.xlu0 %v426
  %v428 = vpop.xlane.xlu0 %427
  %v429 = vsel %vm398, %v370, -inf
  %430 = vmax.xlane.f32.xlu0 %v429
  %v431 = vpop.xlane.xlu0 %430
  %v432 = vsel %vm398, %v375, -inf
  %433 = vmax.xlane.f32.xlu0 %v432
  %v434 = vpop.xlane.xlu0 %433
  %v435 = vsel %vm398, %v380, -inf
  %436 = vmax.xlane.f32.xlu0 %v435
  %v437 = vpop.xlane.xlu0 %436
  %v438 = vsel %vm398, %v385, -inf
  %439 = vmax.xlane.f32.xlu0 %v438
  %v440 = vpop.xlane.xlu0 %439
  %v441 = vsel %vm398, %v390, -inf
  %442 = vmax.xlane.f32.xlu0 %v441
  %v443 = vpop.xlane.xlu0 %442
  %v444 = vsel %vm398, %v395, -inf
  %445 = vmax.xlane.f32.xlu0 %v444
  %v446 = vpop.xlane.xlu0 %445
  %v447 = vsub.f32 %v320, %v401
  %v448 = vsub.f32 %v325, %v404
  %v449 = vsub.f32 %v330, %v407
  %v450 = vsub.f32 %v335, %v410
  %v451 = vsub.f32 %v340, %v413
  %v452 = vsub.f32 %v345, %v416
  %v453 = vsub.f32 %v350, %v419
  %v454 = vsub.f32 %v355, %v422
  %v455 = vsub.f32 %v360, %v425
  %v456 = vsub.f32 %v365, %v428
  %v457 = vsub.f32 %v370, %v431
  %v458 = vsub.f32 %v375, %v434
  %v459 = vsub.f32 %v380, %v437
  %v460 = vsub.f32 %v385, %v440
  %v461 = vsub.f32 %v390, %v443
  %v462 = vsub.f32 %v395, %v446
  %v463 = vmul.f32 %v447, 1.442695
  %v464 = vpow.pop %v463
  %v465 = vmul.f32 %v448, 1.442695
  %v466 = vpow.pop %v465
  %v467 = vmul.f32 %v449, 1.442695
  %v468 = vpow.pop %v467
  %v469 = vmul.f32 %v450, 1.442695
  %v470 = vpow.pop %v469
  %v471 = vmul.f32 %v451, 1.442695
  %v472 = vpow.pop %v471
  %v473 = vmul.f32 %v452, 1.442695
  %v474 = vpow.pop %v473
  %v475 = vmul.f32 %v453, 1.442695
  %v476 = vpow.pop %v475
  %v477 = vmul.f32 %v454, 1.442695
  %v478 = vpow.pop %v477
  %v479 = vmul.f32 %v455, 1.442695
  %v480 = vpow.pop %v479
  %v481 = vmul.f32 %v456, 1.442695
  %v482 = vpow.pop %v481
  %v483 = vmul.f32 %v457, 1.442695
  %v484 = vpow.pop %v483
  %v485 = vmul.f32 %v458, 1.442695
  %v486 = vpow.pop %v485
  %v487 = vmul.f32 %v459, 1.442695
  %v488 = vpow.pop %v487
  %v489 = vmul.f32 %v460, 1.442695
  %v490 = vpow.pop %v489
  %v491 = vmul.f32 %v461, 1.442695
  %v492 = vpow.pop %v491
  %v493 = vmul.f32 %v462, 1.442695
  %v494 = vpow.pop %v493
  %v495 = vsel %vm398, %v464, 0.0
  %496 = vadd.xlane.f32.xlu0 %v495
  %v497 = vpop.xlane.xlu0 %496
  %v498 = vsel %vm398, %v466, 0.0
  %499 = vadd.xlane.f32.xlu0 %v498
  %v500 = vpop.xlane.xlu0 %499
  %v501 = vsel %vm398, %v468, 0.0
  %502 = vadd.xlane.f32.xlu0 %v501
  %v503 = vpop.xlane.xlu0 %502
  %v504 = vsel %vm398, %v470, 0.0
  %505 = vadd.xlane.f32.xlu0 %v504
  %v506 = vpop.xlane.xlu0 %505
  %v507 = vsel %vm398, %v472, 0.0
  %508 = vadd.xlane.f32.xlu0 %v507
  %v509 = vpop.xlane.xlu0 %508
  %v510 = vsel %vm398, %v474, 0.0
  %511 = vadd.xlane.f32.xlu0 %v510
  %v512 = vpop.xlane.xlu0 %511
  %v513 = vsel %vm398, %v476, 0.0
  %514 = vadd.xlane.f32.xlu0 %v513
  %v515 = vpop.xlane.xlu0 %514
  %v516 = vsel %vm398, %v478, 0.0
  %517 = vadd.xlane.f32.xlu0 %v516
  %v518 = vpop.xlane.xlu0 %517
  %v519 = vsel %vm398, %v480, 0.0
  %520 = vadd.xlane.f32.xlu0 %v519
  %v521 = vpop.xlane.xlu0 %520
  %v522 = vsel %vm398, %v482, 0.0
  %523 = vadd.xlane.f32.xlu0 %v522
  %v524 = vpop.xlane.xlu0 %523
  %v525 = vsel %vm398, %v484, 0.0
  %526 = vadd.xlane.f32.xlu0 %v525
  %v527 = vpop.xlane.xlu0 %526
  %v528 = vsel %vm398, %v486, 0.0
  %529 = vadd.xlane.f32.xlu0 %v528
  %v530 = vpop.xlane.xlu0 %529
  %v531 = vsel %vm398, %v488, 0.0
  %532 = vadd.xlane.f32.xlu0 %v531
  %v533 = vpop.xlane.xlu0 %532
  %v534 = vsel %vm398, %v490, 0.0
  %535 = vadd.xlane.f32.xlu0 %v534
  %v536 = vpop.xlane.xlu0 %535
  %v537 = vsel %vm398, %v492, 0.0
  %538 = vadd.xlane.f32.xlu0 %v537
  %v539 = vpop.xlane.xlu0 %538
  %v540 = vsel %vm398, %v494, 0.0
  %541 = vadd.xlane.f32.xlu0 %v540
  %v542 = vpop.xlane.xlu0 %541
  %v543 = vrcp.pop %v497
  %v544 = vmul.f32 %v464, %v543
  %v545 = vrcp.pop %v500
  %v546 = vmul.f32 %v466, %v545
  %v547 = vrcp.pop %v503
  %v548 = vmul.f32 %v468, %v547
  %v549 = vrcp.pop %v506
  %v550 = vmul.f32 %v470, %v549
  %v551 = vrcp.pop %v509
  %v552 = vmul.f32 %v472, %v551
  %v553 = vrcp.pop %v512
  %v554 = vmul.f32 %v474, %v553
  %v555 = vrcp.pop %v515
  %v556 = vmul.f32 %v476, %v555
  %v557 = vrcp.pop %v518
  %v558 = vmul.f32 %v478, %v557
  %v559 = vrcp.pop %v521
  %v560 = vmul.f32 %v480, %v559
  %v561 = vrcp.pop %v524
  %v562 = vmul.f32 %v482, %v561
  %v563 = vrcp.pop %v527
  %v564 = vmul.f32 %v484, %v563
  %v565 = vrcp.pop %v530
  %v566 = vmul.f32 %v486, %v565
  %v567 = vrcp.pop %v533
  %v568 = vmul.f32 %v488, %v567
  %v569 = vrcp.pop %v536
  %v570 = vmul.f32 %v490, %v569
  %v571 = vrcp.pop %v539
  %v572 = vmul.f32 %v492, %v571
  %v573 = vrcp.pop %v542
  %v574 = vmul.f32 %v494, %v573
  %575 = vst.msk [vmem:[%s5] sm:$0xff] %vm398, %v544
  %576 = vst.msk [vmem:[%s5 + $0x8] sm:$0xff] %vm398, %v546
  %577 = vst.msk [vmem:[%s5 + $0x10] sm:$0xff] %vm398, %v548
  %578 = vst.msk [vmem:[%s5 + $0x18] sm:$0xff] %vm398, %v550
  %579 = vst.msk [vmem:[%s5 + $0x20] sm:$0xff] %vm398, %v552
  %580 = vst.msk [vmem:[%s5 + $0x28] sm:$0xff] %vm398, %v554
  %581 = vst.msk [vmem:[%s5 + $0x30] sm:$0xff] %vm398, %v556
  %582 = vst.msk [vmem:[%s5 + $0x38] sm:$0xff] %vm398, %v558
  %583 = vst.msk [vmem:[%s5 + $0x40] sm:$0xff] %vm398, %v560
  %584 = vst.msk [vmem:[%s5 + $0x48] sm:$0xff] %vm398, %v562
  %585 = vst.msk [vmem:[%s5 + $0x50] sm:$0xff] %vm398, %v564
  %586 = vst.msk [vmem:[%s5 + $0x58] sm:$0xff] %vm398, %v566
  %587 = vst.msk [vmem:[%s5 + $0x60] sm:$0xff] %vm398, %v568
  %588 = vst.msk [vmem:[%s5 + $0x68] sm:$0xff] %vm398, %v570
  %589 = vst.msk [vmem:[%s5 + $0x70] sm:$0xff] %vm398, %v572
  %590 = vst.msk [vmem:[%s5 + $0x78] sm:$0xff] %vm398, %v574
  // Predicated region
  $region22: #{tpu_custom_call.1} parent=0 // pred_check
    _
  $region23: #{tpu_custom_call.1} parent=0 // pred_check_branch
    %592 = sbr.rel (0) target = $region25
  $region24: #{tpu_custom_call.1} parent=0 // pred_region
    _
  $region25: #{tpu_custom_call.1} parent=0 // pred_fallthru
    _
  // Predicated region
  $region26: #{tpu_custom_call.1} parent=0 // pred_check
    _
  $region27: #{tpu_custom_call.1} parent=0 // pred_check_branch
    %594 = sbr.rel (0) target = $region29
  $region28: #{tpu_custom_call.1} parent=0 // pred_region
    _
  $region29: #{tpu_custom_call.1} parent=0 // pred_fallthru
    _

</llo_original>
